<compile_context>
chip_gen: v5e
topology: v5e:2x2
jax: 0.10.0
libtpu: 0.0.40
codegen_flags: <defaults>
</compile_context>

<pallas_src>
import functools

import jax
import jax.numpy as jnp
from jax.experimental import pallas as pl
from jax.experimental.pallas import tpu as pltpu


_VMEM_BUFFER_BUDGET = 32 << 20   # double-buffered evidence + label tiles
_VMEM_LIMIT_BYTES = 48 << 20     # <= ~48 MiB per review (v7x has 64 MiB physical)


def _edl_nll_tile_sum_kernel(ev_ref, lbl_ref, out_ref, *, lamb, n_rows, block_rows):
    """Per-tile partial sum of EDL-NLL row values.

    ev_ref:  (block_rows, C)  evidence tile (any float dtype; upcast to f32)
    lbl_ref: (block_rows, 1)  int32 labels for this tile
    out_ref: (8, 128)         f32 block, filled with this tile's partial sum
    """
    alpha = ev_ref[...].astype(jnp.float32) + jnp.float32(lamb)          # (bn, C)
    sum_alpha = jnp.sum(alpha, axis=1, keepdims=True)                    # (bn, 1)

    # Gather alpha at the label via iota-compare + masked lane reduce
    # (VPU select + XLU reduce; avoids log() over the whole (bn, C) tile).
    class_ids = jax.lax.broadcasted_iota(jnp.int32, alpha.shape, 1)      # (bn, C)
    is_lbl = class_ids == lbl_ref[...]                                   # (bn, C)
    alpha_lbl = jnp.sum(jnp.where(is_lbl, alpha, 0.0),
                        axis=1, keepdims=True)                           # (bn, 1)

    # Per-row value; matches sum_c y * (log(sum_alpha) - log(alpha)) when
    # alpha > 0 and the label is in range.
    value = jnp.log(sum_alpha) - jnp.log(alpha_lbl)                      # (bn, 1)

    # Mask out-of-bounds tail rows of the (possibly partial) last tile: their
    # evidence/labels are garbage and must not reach the cross-row reduction.
    row_ids = (pl.program_id(0) * block_rows
               + jax.lax.broadcasted_iota(jnp.int32, value.shape, 0))    # (bn, 1)
    value = jnp.where(row_ids < n_rows, value, 0.0)

    # Reduce over rows (sublane/XLU) and emit a lane-dense, unmasked block.
    tile_sum = jnp.sum(value, axis=0, keepdims=True)                     # (1, 1)
    out_ref[...] = jnp.broadcast_to(tile_sum, (8, 128))


def _round_up(x, m):
    return -(-x // m) * m


def _pick_block_n(n, c, ev_itemsize):
    """Rows per tile from a VMEM byte budget (lane-padding & dtype aware)."""
    lane_c = _round_up(max(int(c), 1), 128)
    # VMEM bytes per row: evidence row (lanes padded to 128) + the (bn, 1)
    # int32 label column (also padded to 128 lanes).  The (8, 128) per-tile
    # output block is negligible.
    row_bytes = lane_c * int(ev_itemsize) + 128 * 4
    bn = _VMEM_BUFFER_BUDGET // (2 * row_bytes)     # 2x: double-buffered pipeline
    bn = max(8, min(bn, _round_up(n, 8)))
    # Keep >= 4 grid steps (v7x megacore sharding of the "parallel" axis) as
    # long as that doesn't shrink tiles below ~1 MiB of evidence+label.
    min_rows = max(8, ((1 << 20) // row_bytes) // 8 * 8)
    four_way = _round_up(-(-n // 4), 8)
    if four_way >= min_rows:
        bn = min(bn, four_way)
    return max(8, (bn // 8) * 8)


def edl_nll_loss_pallas(evidence, label, *, lamb=1.0, loss_weight=1.0, block_n=None):
    """Pallas implementation of EDLNLLLoss.forward for 2-D evidence (N, C)."""
    # TODO(synk): only the 2-D (N, C) case is supported; the PyTorch module's
    # dim=1 sums are only consistent with F.one_hot for 2-D inputs anyway.
    N, C = evidence.shape
    esize = jnp.dtype(evidence.dtype).itemsize
    if block_n is None:
        block_n = _pick_block_n(N, C, esize)
    block_n = max(8, (int(block_n) // 8) * 8)
    num_tiles = int(pl.cdiv(N, block_n))

    label2d = label.astype(jnp.int32).reshape(N, 1)

    kernel = functools.partial(_edl_nll_tile_sum_kernel,
                               lamb=float(lamb), n_rows=N, block_rows=block_n)

    tile_blocks = pl.pallas_call(
        kernel,
        out_shape=jax.ShapeDtypeStruct((num_tiles * 8, 128), jnp.float32),
        grid_spec=pltpu.PrefetchScalarGridSpec(
            num_scalar_prefetch=0,
            grid=(num_tiles,),
            in_specs=[
                pl.BlockSpec((block_n, C), lambda i: (i, 0)),
                pl.BlockSpec((block_n, 1), lambda i: (i, 0)),
            ],
            out_specs=pl.BlockSpec((8, 128), lambda i: (i, 0)),
        ),
        compiler_params=pltpu.CompilerParams(
            # Every tile is independent -> batch axis can be sharded across
            # TensorCores (v7x megacore win; no-op on v5e/v6e).
            dimension_semantics=("parallel",),
            vmem_limit_bytes=_VMEM_LIMIT_BYTES,
        ),
    )(evidence, label2d)

    # Finish the reduction in plain JAX: one partial sum per tile, divide by
    # the true row count N (tail rows were masked to 0 inside the kernel).
    tile_sums = tile_blocks[::8, 0]                  # (num_tiles,)
    return jnp.float32(loss_weight) * jnp.sum(tile_sums) / jnp.float32(N)


def edl_nll_loss_ref(evidence, label, *, lamb=1.0, loss_weight=1.0):
    """Pure-JAX reference matching the PyTorch module exactly."""
    num_classes = evidence.shape[-1]
    alpha = evidence.astype(jnp.float32) + lamb
    y = jax.nn.one_hot(label, num_classes, dtype=jnp.float32)
    sum_alpha = jnp.sum(alpha, axis=1, keepdims=True)
    value = jnp.sum(y * (jnp.log(sum_alpha) - jnp.log(alpha)), axis=1, keepdims=True)
    return loss_weight * jnp.mean(value)


if __name__ == "__main__":
    key = jax.random.PRNGKey(0)
    k_ev, k_lbl, k_ev2, k_lbl2 = jax.random.split(key, 4)

    # Test 1: small single-tile case (auto block size).
    N, C = 8, 32
    evidence = jax.nn.softplus(jax.random.normal(k_ev, (N, C), dtype=jnp.float32))
    label = jax.random.randint(k_lbl, (N,), 0, C, dtype=jnp.int32)

    loss = edl_nll_loss_pallas(evidence, label, lamb=1.0, loss_weight=1.0)
    loss = jax.block_until_ready(loss)
    ref = edl_nll_loss_ref(evidence, label, lamb=1.0, loss_weight=1.0)
    assert jnp.allclose(loss, ref, rtol=1e-5, atol=1e-5), (loss, ref)

    # Test 2: multi-tile grid with a partial edge tile (no host-side padding):
    # N=40, block_n=16 -> 3 tiles, last tile has 8 valid rows masked in-kernel.
    N2, C2 = 40, 32
    evidence2 = jax.nn.softplus(jax.random.normal(k_ev2, (N2, C2), dtype=jnp.float32))
    label2 = jax.random.randint(k_lbl2, (N2,), 0, C2, dtype=jnp.int32)

    loss2 = edl_nll_loss_pallas(evidence2, label2, lamb=1.0, loss_weight=0.5, block_n=16)
    loss2 = jax.block_until_ready(loss2)
    ref2 = edl_nll_loss_ref(evidence2, label2, lamb=1.0, loss_weight=0.5)
    assert jnp.allclose(loss2, ref2, rtol=1e-5, atol=1e-5), (loss2, ref2)

    print("KERNEL_OK")
</pallas_src>

<mosaic_0001>
module attributes {stable_mosaic.version = 11 : i64} {
  func.func @_edl_nll_tile_sum_kernel(%arg0: i32, %arg1: memref<8x32xf32, #tpu.memory_space<vmem>>, %arg2: memref<8x1xi32, #tpu.memory_space<vmem>>, %arg3: memref<8x128xf32, #tpu.memory_space<vmem>>) attributes {dimension_semantics = [#tpu.dimension_semantics<parallel>], iteration_bounds = array<i64: 1>, scalar_prefetch = 0 : i64, scratch_operands = 0 : i64, tpu.core_type = #tpu.core_type<tc>, window_params = [{transform_indices = @transform_0, window_bounds = array<i64: 8, 32>}, {transform_indices = @transform_1, window_bounds = array<i64: 8, 1>}, {transform_indices = @transform_2, window_bounds = array<i64: 8, 128>}]} {
    %c0 = arith.constant 0 : index
    %c0_0 = arith.constant 0 : index
    %0 = vector.load %arg1[%c0, %c0_0] : memref<8x32xf32, #tpu.memory_space<vmem>>, vector<8x32xf32>
    %cst = arith.constant 1.000000e+00 : f32
    %1 = vector.broadcast %cst : f32 to vector<8x32xf32>
    %2 = arith.addf %0, %1 : vector<8x32xf32>
    %cst_1 = arith.constant dense<0.000000e+00> : vector<8xf32>
    %3 = vector.multi_reduction <add>, %2, %cst_1 [1] : vector<8x32xf32> to vector<8xf32>
    %4 = vector.shape_cast %3 : vector<8xf32> to vector<8x1xf32>
    %5 = tpu.iota {dimensions = array<i32: 1>} : vector<8x32xi32>
    %c0_2 = arith.constant 0 : index
    %c0_3 = arith.constant 0 : index
    %6 = vector.load %arg2[%c0_2, %c0_3] : memref<8x1xi32, #tpu.memory_space<vmem>>, vector<8x1xi32>
    %7 = vector.broadcast %6 : vector<8x1xi32> to vector<8x32xi32>
    %8 = arith.cmpi eq, %5, %7 : vector<8x32xi32>
    %cst_4 = arith.constant 0.000000e+00 : f32
    %9 = vector.broadcast %cst_4 : f32 to vector<8x32xf32>
    %10 = arith.select %8, %2, %9 : vector<8x32xi1>, vector<8x32xf32>
    %cst_5 = arith.constant dense<0.000000e+00> : vector<8xf32>
    %11 = vector.multi_reduction <add>, %10, %cst_5 [1] : vector<8x32xf32> to vector<8xf32>
    %12 = vector.shape_cast %11 : vector<8xf32> to vector<8x1xf32>
    %13 = math.log %4 : vector<8x1xf32>
    %14 = math.log %12 : vector<8x1xf32>
    %15 = arith.subf %13, %14 : vector<8x1xf32>
    %c8_i32 = arith.constant 8 : i32
    %16 = arith.muli %arg0, %c8_i32 : i32
    %17 = tpu.iota {dimensions = array<i32: 0>} : vector<8x1xi32>
    %18 = vector.broadcast %16 : i32 to vector<8x1xi32>
    %19 = arith.addi %18, %17 : vector<8x1xi32>
    %c8_i32_6 = arith.constant 8 : i32
    %20 = vector.broadcast %c8_i32_6 : i32 to vector<8x1xi32>
    %21 = arith.cmpi slt, %19, %20 : vector<8x1xi32>
    %cst_7 = arith.constant 0.000000e+00 : f32
    %22 = vector.broadcast %cst_7 : f32 to vector<8x1xf32>
    %23 = arith.select %21, %15, %22 : vector<8x1xi1>, vector<8x1xf32>
    %cst_8 = arith.constant dense<0.000000e+00> : vector<1xf32>
    %24 = vector.multi_reduction <add>, %23, %cst_8 [0] : vector<8x1xf32> to vector<1xf32>
    %25 = vector.shape_cast %24 : vector<1xf32> to vector<1x1xf32>
    %26 = vector.shape_cast %25 : vector<1x1xf32> to vector<1x1xf32>
    %27 = vector.broadcast %26 : vector<1x1xf32> to vector<8x128xf32>
    %c0_9 = arith.constant 0 : index
    %c0_10 = arith.constant 0 : index
    %28 = vector.load %arg3[%c0_9, %c0_10] : memref<8x128xf32, #tpu.memory_space<vmem>>, vector<8x128xf32>
    tpu.vector_store %arg3[%c0_9, %c0_10], %27 {strides = array<i32>} : memref<8x128xf32, #tpu.memory_space<vmem>>, vector<8x128xf32>,
    return
  }
  func.func @transform_0(%arg0: i32) -> (i32, i32) {
    %c0_i32 = arith.constant 0 : i32
    %c0_i32_0 = arith.constant 0 : i32
    return %arg0, %c0_i32 : i32, i32
  }
  func.func @transform_1(%arg0: i32) -> (i32, i32) {
    %c0_i32 = arith.constant 0 : i32
    %c0_i32_0 = arith.constant 0 : i32
    return %arg0, %c0_i32 : i32, i32
  }
  func.func @transform_2(%arg0: i32) -> (i32, i32) {
    %c0_i32 = arith.constant 0 : i32
    %c0_i32_0 = arith.constant 0 : i32
    return %arg0, %c0_i32 : i32, i32
  }
}

</mosaic_0001>

<llo_original>
// kernel: tpu_custom_call.1
$region0: #{tpu_custom_call.1}
  #allocation0 [shape = 'u32[]', space=smem, size = 0x4, offset = 0x4, fixed_abs, tag = 'smem constant byte address 0x4 - core index']
  #allocation1 [shape = 'u32[72,128]{1,0:T(1,128)}', space=vmem, size = 0x9000, scoped, tag = 'internal scratch']
  %s0 = inlined_call_operand.vmem [shape: f32[8,32], index: 0, kind: input, shape index: {}]
  %s1 = inlined_call_operand.vmem [shape: s32[8,1], index: 1, kind: input, shape index: {}]
  %s2 = inlined_call_operand.hbm [shape: f32[8,128], index: 2, kind: output, shape index: {}]
  %s3 = sld [smem:[#allocation0]]
  $region18: #{tpu_custom_call.1} parent=0
    _
  %s5 = ssub.s32 1, %s3
  %s6 = scalar_select 0, %s5, %s3
  $region1: #{tpu_custom_call.1} parent=0
    #allocation2 [shape = 'u8[4096]{0}', space=vmem, size = 0x1000, scoped, tag = 'output window, operand 0, single buffered']
    #allocation3 [shape = 's32[1]{0}', space=sflag, size = 0x4, scoped, tag = 'scoped memory for tpu_custom_call.1']
    %7 = vsyncpa [#allocation3], 0
    // Predicated region
    $region2: #{tpu_custom_call.1} parent=1 // pred_check
      _
    $region3: #{tpu_custom_call.1} parent=1 // pred_check_branch
      %9 = sbr.rel (0) target = $region5
    $region4: #{tpu_custom_call.1} parent=1 // pred_region
      _
    $region5: #{tpu_custom_call.1} parent=1 // pred_fallthru
      _
    // Predicated region
    $region6: #{tpu_custom_call.1} parent=1 // pred_check
      _
    $region7: #{tpu_custom_call.1} parent=1 // pred_check_branch
      %11 = sbr.rel (0) target = $region9
    $region8: #{tpu_custom_call.1} parent=1 // pred_region
      _
    $region9: #{tpu_custom_call.1} parent=1 // pred_fallthru
      _
    %v12 = vld [vmem:[%s0] sm:$0xff]
    %v13 = vadd.f32 %v12, 1.0
    %vm14 = vcmask 261120
    %v15 = vsel %vm14, %v13, 0.0
    %16 = vadd.xlane.f32.xlu0 %v15
    %v17 = vpop.xlane.xlu0 %16
    %v18 = vlaneseq
    %v19 = vand.u32 %v18, 127
    %v20 = vld [vmem:[%s1] sm:$0xff]
    %21 = vset.pattern.permute.xlu0 0
    %22 = vperm.xlu0 %21, %v20
    %v23 = vpop.permute.xlu0 %22
    %vm24 = vcmp.eq.s32.totalorder %v19, %v23
    %v25 = vsel %vm24, %v13, 0.0
    %v26 = vsel %vm14, %v25, 0.0
    %27 = vadd.xlane.f32.xlu0 %v26
    %v28 = vpop.xlane.xlu0 %27
    %v29 = vlog2.pop %v17
    %v30 = vmul.f32 %v29, 0.6931472
    %v31 = vlog2.pop %v28
    %v32 = vmul.f32 %v31, 0.6931472
    %v33 = vsub.f32 %v30, %v32
    %s34 = smul.u32 0, 8
    %v35 = vlaneseq
    %v36 = vshrl.u32 %v35, 7
    %v37 = vstv %s34
    %v38 = vadd.s32 %v37, %v36
    %vm39 = vcmp.lt.s32.totalorder %v38, 8
    %v40 = vsel %vm39, %v33, 0.0
    %v41 = vrot.slane %v40, 4
    %v42 = vadd.f32 %v40, %v41
    %v43 = vrot.slane %v42, 2
    %v44 = vadd.f32 %v42, %v43
    %v45 = vrot.slane %v44, 1
    %v46 = vadd.f32 %v44, %v45
    %47 = vst [vmem:[#allocation2] sm:$0xff] %v46
    // Predicated region
    $region10: #{tpu_custom_call.1} parent=1 // pred_check
      _
    $region11: #{tpu_custom_call.1} parent=1 // pred_check_branch
      %49 = sbr.rel (0) target = $region13
    $region12: #{tpu_custom_call.1} parent=1 // pred_region
      %51 = vsyncadd [#allocation3], 0
      %s53 = sshll.u32 [#allocation2], 4
      %s54 = int_to_ptr.vmem [resolvable:$true] %s53
      %s55 = sshll.u32 %s2, 4
      %s56 = int_to_ptr.hbm [resolvable:$true] %s55
      %58 = dma.vmem_to_hbm [thread:$0]  %s54, 128, %s56, [#allocation3]
    $region13: #{tpu_custom_call.1} parent=1 // pred_fallthru
      _
    // Predicated region
    $region14: #{tpu_custom_call.1} parent=1 // pred_check
      _
    $region15: #{tpu_custom_call.1} parent=1 // pred_check_branch
      %60 = sbr.rel (0) target = $region17
    $region16: #{tpu_custom_call.1} parent=1 // pred_region
      %62 = dma.done [#allocation3], 128
    $region17: #{tpu_custom_call.1} parent=1 // pred_fallthru
      _
    %63 = vsyncpa [#allocation3], 1

</llo_original>
